<compile_context>
chip_gen: v5e
topology: v5e:2x2
jax: 0.10.0
libtpu: 0.0.40
codegen_flags: <defaults>
</compile_context>

<pallas_src>
import functools

import jax
import jax.numpy as jnp
from jax.experimental import pallas as pl
from jax.experimental.pallas import tpu as pltpu


def _round_up(n, m):
    return ((n + m - 1) // m) * m


def _mlp_kernel(*refs, apply_dropout, keep_thresh, inv_keep):
    if apply_dropout:
        x_ref, bits_ref, w1_ref, b1_ref, w2_ref, b2_ref, o_ref = refs
    else:
        x_ref, w1_ref, b1_ref, w2_ref, b2_ref, o_ref = refs

    # fc1 on the MXU: (TB, Din) @ (Din, H), f32 accumulation.
    h = jnp.dot(x_ref[...], w1_ref[...], preferred_element_type=jnp.float32)
    h = h + b1_ref[...]

    # Inverted dropout: uint32-threshold compare + one select (2 VALU ops).
    if apply_dropout:
        keep = bits_ref[...] < jnp.asarray(keep_thresh, dtype=jnp.uint32)
        h = jnp.where(keep, h * inv_keep, 0.0)

    # fc2 with num_classes == 1: lane reduction instead of an N=1 MXU matmul.
    logits = jnp.sum(h * w2_ref[...], axis=-1, keepdims=True) + b2_ref[...]

    o_ref[...] = jax.nn.sigmoid(logits).astype(o_ref.dtype)


def neuralnet_forward(x, w1, b1, w2, b2, *, p=0.5, training=True,
                      dropout_bits=None, tile_b=256, matmul_dtype=None):
    """Pallas forward pass of NeuralNet.

    x:  (B, Din) float32
    w1: (Din, H), b1: (H,)   -- fc1 weight stored transposed vs. torch
    w2: (H, 1),  b2: (1,)    -- fc2 (num_classes must be 1, as in the module)
    dropout_bits: (B, H) uint32 random bits (required when training and p > 0)
    """
    B, Din = x.shape
    H = w1.shape[1]
    C = w2.shape[1]
    assert C == 1, "kernel implements num_classes == 1 (as in the module spec)"
    assert tile_b % 8 == 0

    apply_dropout = bool(training) and float(p) > 0.0
    if apply_dropout and dropout_bits is None:
        raise ValueError("dropout_bits (uint32, shape (B, H)) required when "
                         "training=True and p > 0")

    # Padded / tiled geometry (8-row sublane tiles, 128-lane feature dims).
    tb = min(int(tile_b), _round_up(B, 8))
    B_pad = _round_up(B, tb)
    Din_pad = _round_up(Din, 128)
    H_pad = _round_up(H, 128)
    num_tiles = B_pad // tb

    # Zero-padding is exact for this network (padded hidden units stay 0 and
    # contribute 0 through fc2); padded batch rows are sliced off at the end.
    x_p = jnp.pad(x, ((0, B_pad - B), (0, Din_pad - Din)))
    w1_p = jnp.pad(w1, ((0, Din_pad - Din), (0, H_pad - H)))
    b1_p = jnp.pad(b1.reshape(1, H), ((0, 0), (0, H_pad - H)))
    w2_p = jnp.pad(w2.reshape(1, H), ((0, 0), (0, H_pad - H)))   # (1, H_pad)
    b2_p = b2.reshape(1, 1)

    if matmul_dtype is not None:           # e.g. jnp.bfloat16 on v6e/v7x
        x_p = x_p.astype(matmul_dtype)
        w1_p = w1_p.astype(matmul_dtype)

    keep_thresh = min(int((1.0 - float(p)) * (2 ** 32)), 2 ** 32 - 1)
    inv_keep = 1.0 / (1.0 - float(p)) if (apply_dropout and p < 1.0) else 1.0

    kernel = functools.partial(_mlp_kernel, apply_dropout=apply_dropout,
                               keep_thresh=keep_thresh, inv_keep=inv_keep)

    # Per-batch-tile inputs.
    in_specs = [pl.BlockSpec((tb, Din_pad), lambda i: (i, 0))]
    inputs = [x_p]
    if apply_dropout:
        bits_p = jnp.pad(dropout_bits.astype(jnp.uint32),
                         ((0, B_pad - B), (0, H_pad - H)))
        in_specs.append(pl.BlockSpec((tb, H_pad), lambda i: (i, 0)))
        inputs.append(bits_p)
    # Weights / biases: VMEM-resident across the whole grid.
    in_specs += [
        pl.BlockSpec((Din_pad, H_pad), lambda i: (0, 0)),
        pl.BlockSpec((1, H_pad), lambda i: (0, 0)),
        pl.BlockSpec((1, H_pad), lambda i: (0, 0)),
        pl.BlockSpec((1, 1), lambda i: (0, 0)),
    ]
    inputs += [w1_p, b1_p, w2_p, b2_p]

    out = pl.pallas_call(
        kernel,
        out_shape=jax.ShapeDtypeStruct((B_pad, 1), jnp.float32),
        grid=(num_tiles,),
        in_specs=in_specs,
        out_specs=pl.BlockSpec((tb, 1), lambda i: (i, 0)),
        compiler_params=pltpu.CompilerParams(
            dimension_semantics=("parallel",)),
    )(*inputs)

    return out[:B]


def _init_linear(key, fan_in, fan_out):
    """Deterministic init mimicking torch.nn.Linear (uniform +-1/sqrt(fan_in)).
    Returns W as (fan_in, fan_out), i.e. already transposed for x @ W."""
    kw, kb = jax.random.split(key)
    bound = 1.0 / jnp.sqrt(jnp.asarray(fan_in, jnp.float32))
    w = jax.random.uniform(kw, (fan_in, fan_out), jnp.float32, -bound, bound)
    b = jax.random.uniform(kb, (fan_out,), jnp.float32, -bound, bound)
    return w, b


if __name__ == "__main__":
    # Small shapes consistent with the module: batch=8, input_size=64,
    # hidden_size=32 (stand-in for 1000), num_classes=1.
    B, INPUT_SIZE, HIDDEN_SIZE, NUM_CLASSES = 8, 64, 32, 1
    P = 0.5

    key = jax.random.PRNGKey(0)
    kx, k1, k2, kd = jax.random.split(key, 4)

    x = jax.random.normal(kx, (B, INPUT_SIZE), dtype=jnp.float32)
    w1, b1 = _init_linear(k1, INPUT_SIZE, HIDDEN_SIZE)
    w2, b2 = _init_linear(k2, HIDDEN_SIZE, NUM_CLASSES)

    # Host-generated dropout bits (distributionally identical to torch's mask;
    # bitwise identity with torch's RNG is not reproducible).
    bits = jax.random.bits(kd, (B, HIDDEN_SIZE), dtype=jnp.uint32)

    # Training mode (dropout active).
    out_train = neuralnet_forward(x, w1, b1, w2, b2, p=P, training=True,
                                  dropout_bits=bits)
    out_train = jax.block_until_ready(out_train)

    # Pure-JAX references (same bits -> exact comparison possible).
    keep_thresh = min(int((1.0 - P) * (2 ** 32)), 2 ** 32 - 1)
    keep = bits < jnp.uint32(keep_thresh)
    h_ref = x @ w1 + b1
    h_ref = jnp.where(keep, h_ref / (1.0 - P), 0.0)
    ref_train = jax.nn.sigmoid(h_ref @ w2 + b2)

    out_eval = neuralnet_forward(x, w1, b1, w2, b2, p=P, training=False)
    ref_eval = jax.nn.sigmoid((x @ w1 + b1) @ w2 + b2)

    assert out_train.shape == (B, NUM_CLASSES)
    assert jnp.allclose(out_train, ref_train, atol=1e-5, rtol=1e-5)
    assert jnp.allclose(out_eval, ref_eval, atol=1e-5, rtol=1e-5)

    print("KERNEL_OK")
</pallas_src>

<mosaic_0001>
module attributes {stable_mosaic.version = 11 : i64} {
  func.func @_mlp_kernel(%arg0: i32, %arg1: memref<8x128xf32, #tpu.memory_space<vmem>>, %arg2: memref<8x128xi32, #tpu.memory_space<vmem>>, %arg3: memref<128x128xf32, #tpu.memory_space<vmem>>, %arg4: memref<1x128xf32, #tpu.memory_space<vmem>>, %arg5: memref<1x128xf32, #tpu.memory_space<vmem>>, %arg6: memref<1x1xf32, #tpu.memory_space<vmem>>, %arg7: memref<8x1xf32, #tpu.memory_space<vmem>>) attributes {dimension_semantics = [#tpu.dimension_semantics<parallel>], iteration_bounds = array<i64: 1>, scalar_prefetch = 0 : i64, scratch_operands = 0 : i64, tpu.core_type = #tpu.core_type<tc>, window_params = [{transform_indices = @transform_0, window_bounds = array<i64: 8, 128>}, {transform_indices = @transform_1, window_bounds = array<i64: 8, 128>}, {pipeline_mode = #tpu.pipeline_mode<synchronous>, transform_indices = @transform_2, window_bounds = array<i64: 128, 128>}, {pipeline_mode = #tpu.pipeline_mode<synchronous>, transform_indices = @transform_3, window_bounds = array<i64: 1, 128>}, {pipeline_mode = #tpu.pipeline_mode<synchronous>, transform_indices = @transform_4, window_bounds = array<i64: 1, 128>}, {pipeline_mode = #tpu.pipeline_mode<synchronous>, transform_indices = @transform_5, window_bounds = array<i64: 1, 1>}, {transform_indices = @transform_6, window_bounds = array<i64: 8, 1>}]} {
    %c0 = arith.constant 0 : index
    %c0_0 = arith.constant 0 : index
    %0 = vector.load %arg1[%c0, %c0_0] : memref<8x128xf32, #tpu.memory_space<vmem>>, vector<8x128xf32>
    %c0_1 = arith.constant 0 : index
    %c0_2 = arith.constant 0 : index
    %1 = vector.load %arg3[%c0_1, %c0_2] : memref<128x128xf32, #tpu.memory_space<vmem>>, vector<128x128xf32>
    %cst = arith.constant dense<0.000000e+00> : vector<8x128xf32>
    %2 = tpu.matmul %0, %1, %cst {dimension_numbers = #tpu.dot_dimension_numbers<[1], [0], [0], [1], [0, 0, 1, 1], [], []>} : vector<8x128xf32>, vector<128x128xf32>, vector<8x128xf32> -> vector<8x128xf32>
    %c0_3 = arith.constant 0 : index
    %c0_4 = arith.constant 0 : index
    %3 = vector.load %arg4[%c0_3, %c0_4] : memref<1x128xf32, #tpu.memory_space<vmem>>, vector<1x128xf32>
    %4 = vector.broadcast %3 : vector<1x128xf32> to vector<8x128xf32>
    %5 = arith.addf %2, %4 : vector<8x128xf32>
    %c0_5 = arith.constant 0 : index
    %c0_6 = arith.constant 0 : index
    %6 = vector.load %arg2[%c0_5, %c0_6] : memref<8x128xi32, #tpu.memory_space<vmem>>, vector<8x128xi32>
    %c-2147483648_i32 = arith.constant -2147483648 : i32
    %7 = vector.broadcast %c-2147483648_i32 : i32 to vector<8x128xi32>
    %8 = arith.cmpi ult, %6, %7 : vector<8x128xi32>
    %cst_7 = arith.constant 2.000000e+00 : f32
    %9 = vector.broadcast %cst_7 : f32 to vector<8x128xf32>
    %10 = arith.mulf %5, %9 : vector<8x128xf32>
    %cst_8 = arith.constant 0.000000e+00 : f32
    %11 = vector.broadcast %cst_8 : f32 to vector<8x128xf32>
    %12 = arith.select %8, %10, %11 : vector<8x128xi1>, vector<8x128xf32>
    %c0_9 = arith.constant 0 : index
    %c0_10 = arith.constant 0 : index
    %13 = vector.load %arg5[%c0_9, %c0_10] : memref<1x128xf32, #tpu.memory_space<vmem>>, vector<1x128xf32>
    %14 = vector.broadcast %13 : vector<1x128xf32> to vector<8x128xf32>
    %15 = arith.mulf %12, %14 : vector<8x128xf32>
    %cst_11 = arith.constant dense<0.000000e+00> : vector<8xf32>
    %16 = vector.multi_reduction <add>, %15, %cst_11 [1] : vector<8x128xf32> to vector<8xf32>
    %17 = vector.shape_cast %16 : vector<8xf32> to vector<8x1xf32>
    %c0_12 = arith.constant 0 : index
    %c0_13 = arith.constant 0 : index
    %18 = vector.load %arg6[%c0_12, %c0_13] : memref<1x1xf32, #tpu.memory_space<vmem>>, vector<1x1xf32>
    %19 = vector.broadcast %18 : vector<1x1xf32> to vector<8x1xf32>
    %20 = arith.addf %17, %19 : vector<8x1xf32>
    %21 = arith.negf %20 : vector<8x1xf32>
    %22 = math.exp %21 : vector<8x1xf32>
    %cst_14 = arith.constant 1.000000e+00 : f32
    %23 = vector.broadcast %cst_14 : f32 to vector<8x1xf32>
    %24 = arith.addf %23, %22 : vector<8x1xf32>
    %25 = arith.divf %23, %24 : vector<8x1xf32>
    %c0_15 = arith.constant 0 : index
    %c0_16 = arith.constant 0 : index
    %26 = vector.load %arg7[%c0_15, %c0_16] : memref<8x1xf32, #tpu.memory_space<vmem>>, vector<8x1xf32>
    tpu.vector_store %arg7[%c0_15, %c0_16], %25 {strides = array<i32>} : memref<8x1xf32, #tpu.memory_space<vmem>>, vector<8x1xf32>,
    return
  }
  func.func @transform_0(%arg0: i32) -> (i32, i32) {
    %c0_i32 = arith.constant 0 : i32
    %c0_i32_0 = arith.constant 0 : i32
    return %arg0, %c0_i32 : i32, i32
  }
  func.func @transform_1(%arg0: i32) -> (i32, i32) {
    %c0_i32 = arith.constant 0 : i32
    %c0_i32_0 = arith.constant 0 : i32
    return %arg0, %c0_i32 : i32, i32
  }
  func.func @transform_2(%arg0: i32) -> (i32, i32) {
    %c0_i32 = arith.constant 0 : i32
    %c0_i32_0 = arith.constant 0 : i32
    %c0_i32_1 = arith.constant 0 : i32
    return %c0_i32, %c0_i32_0 : i32, i32
  }
  func.func @transform_3(%arg0: i32) -> (i32, i32) {
    %c0_i32 = arith.constant 0 : i32
    %c0_i32_0 = arith.constant 0 : i32
    %c0_i32_1 = arith.constant 0 : i32
    return %c0_i32, %c0_i32_0 : i32, i32
  }
  func.func @transform_4(%arg0: i32) -> (i32, i32) {
    %c0_i32 = arith.constant 0 : i32
    %c0_i32_0 = arith.constant 0 : i32
    %c0_i32_1 = arith.constant 0 : i32
    return %c0_i32, %c0_i32_0 : i32, i32
  }
  func.func @transform_5(%arg0: i32) -> (i32, i32) {
    %c0_i32 = arith.constant 0 : i32
    %c0_i32_0 = arith.constant 0 : i32
    %c0_i32_1 = arith.constant 0 : i32
    return %c0_i32, %c0_i32_0 : i32, i32
  }
  func.func @transform_6(%arg0: i32) -> (i32, i32) {
    %c0_i32 = arith.constant 0 : i32
    %c0_i32_0 = arith.constant 0 : i32
    return %arg0, %c0_i32 : i32, i32
  }
}

</mosaic_0001>

<llo_original>
// kernel: tpu_custom_call.1
$region0: #{tpu_custom_call.1}
  #allocation0 [shape = 'u32[]', space=smem, size = 0x4, offset = 0x4, fixed_abs, tag = 'smem constant byte address 0x4 - core index']
  #allocation1 [shape = 'u32[72,128]{1,0:T(1,128)}', space=vmem, size = 0x9000, scoped, tag = 'internal scratch']
  #allocation2 [shape = 'f32[1,1]{1,0:T(1,128)S(1)}', space=vmem, size = 0x200, scoped, tag = 'scoped memory for tpu_custom_call.1']
  %s0 = inlined_call_operand.hbm [shape: f32[8,128], index: 0, kind: input, shape index: {}]
  %s1 = inlined_call_operand.hbm [shape: u32[8,128], index: 1, kind: input, shape index: {}]
  %s2 = inlined_call_operand.hbm [shape: f32[128,128], index: 2, kind: input, shape index: {}]
  %s3 = inlined_call_operand.vmem [shape: f32[1,128], index: 3, kind: input, shape index: {}]
  %s4 = inlined_call_operand.vmem [shape: f32[1,128], index: 4, kind: input, shape index: {}]
  %s5 = inlined_call_operand.<no memory space> [shape: f32[1,1], index: 5, kind: input, shape index: {}]
  %s6 = inlined_call_operand.vmem [shape: f32[8,1], index: 6, kind: output, shape index: {}]
  %s7 = sld [smem:[#allocation0]]
  $region46: #{tpu_custom_call.1} parent=0
    _
  %s9 = ssub.s32 1, %s7
  %s10 = scalar_select 0, %s9, %s7
  %v11 = vstv %s5
  %12 = vst [vmem:[#allocation2] sm:$0x1] %v11
  $region1: #{tpu_custom_call.1} parent=0
    #allocation3 [shape = 'u8[4096]{0}', space=vmem, size = 0x1000, scoped, tag = 'input window, operand 0, single buffered']
    #allocation4 [shape = 's32[1]{0}', space=sflag, size = 0x4, scoped, tag = 'scoped memory for tpu_custom_call.1']
    #allocation5 [shape = 'u8[4096]{0}', space=vmem, size = 0x1000, scoped, tag = 'input window, operand 1, single buffered']
    #allocation6 [shape = 's32[1]{0}', space=sflag, size = 0x4, scoped, tag = 'scoped memory for tpu_custom_call.1']
    #allocation7 [shape = 'u8[65536]{0}', space=vmem, size = 0x10000, scoped, tag = 'input window, operand 2, single buffered']
    %13 = vsyncpa [#allocation4], 0
    %14 = vsyncpa [#allocation6], 0
    // Predicated region
    $region2: #{tpu_custom_call.1} parent=1 // pred_check
      _
    $region3: #{tpu_custom_call.1} parent=1 // pred_check_branch
      %16 = sbr.rel (0) target = $region5
    $region4: #{tpu_custom_call.1} parent=1 // pred_region
      %18 = vsyncadd [#allocation4], 0
      %s20 = sshll.u32 %s0, 4
      %s21 = int_to_ptr.hbm [resolvable:$true] %s20
      %s22 = sshll.u32 [#allocation3], 4
      %s23 = int_to_ptr.vmem [resolvable:$true] %s22
      %25 = dma.hbm_to_vmem [thread:$0]  %s21, 128, %s23, [#allocation4]
    $region5: #{tpu_custom_call.1} parent=1 // pred_fallthru
      _
    // Predicated region
    $region6: #{tpu_custom_call.1} parent=1 // pred_check
      _
    $region7: #{tpu_custom_call.1} parent=1 // pred_check_branch
      %27 = sbr.rel (0) target = $region9
    $region8: #{tpu_custom_call.1} parent=1 // pred_region
      %29 = vsyncadd [#allocation6], 0
      %s31 = sshll.u32 %s1, 4
      %s32 = int_to_ptr.hbm [resolvable:$true] %s31
      %s33 = sshll.u32 [#allocation5], 4
      %s34 = int_to_ptr.vmem [resolvable:$true] %s33
      %36 = dma.hbm_to_vmem [thread:$0]  %s32, 128, %s34, [#allocation6]
    $region9: #{tpu_custom_call.1} parent=1 // pred_fallthru
      _
    // Predicated region
    $region10: #{tpu_custom_call.1} parent=1 // pred_check
      _
    $region11: #{tpu_custom_call.1} parent=1 // pred_check_branch
      %38 = sbr.rel (0) target = $region13
    $region12: #{tpu_custom_call.1} parent=1 // pred_region
      %40 = vsyncadd [#allocation6], 0
      %s41 = sshll.u32 %s2, 4
      %s42 = int_to_ptr.hbm [resolvable:$true] %s41
      %s43 = sshll.u32 [#allocation7], 4
      %s44 = int_to_ptr.vmem [resolvable:$true] %s43
      %49 = dma.hbm_to_vmem [thread:$0]  %s42, 2048, %s44, [#allocation6], 128, 128, 8
    $region13: #{tpu_custom_call.1} parent=1 // pred_fallthru
      _
    // Predicated region
    $region14: #{tpu_custom_call.1} parent=1 // pred_check
      _
    $region15: #{tpu_custom_call.1} parent=1 // pred_check_branch
      %51 = sbr.rel (0) target = $region17
    $region16: #{tpu_custom_call.1} parent=1 // pred_region
      _
    $region17: #{tpu_custom_call.1} parent=1 // pred_fallthru
      _
    // Predicated region
    $region18: #{tpu_custom_call.1} parent=1 // pred_check
      _
    $region19: #{tpu_custom_call.1} parent=1 // pred_check_branch
      %53 = sbr.rel (0) target = $region21
    $region20: #{tpu_custom_call.1} parent=1 // pred_region
      _
    $region21: #{tpu_custom_call.1} parent=1 // pred_fallthru
      _
    // Predicated region
    $region22: #{tpu_custom_call.1} parent=1 // pred_check
      _
    $region23: #{tpu_custom_call.1} parent=1 // pred_check_branch
      %55 = sbr.rel (0) target = $region25
    $region24: #{tpu_custom_call.1} parent=1 // pred_region
      _
    $region25: #{tpu_custom_call.1} parent=1 // pred_fallthru
      _
    // Predicated region
    $region26: #{tpu_custom_call.1} parent=1 // pred_check
      _
    $region27: #{tpu_custom_call.1} parent=1 // pred_check_branch
      %57 = sbr.rel (0) target = $region29
    $region28: #{tpu_custom_call.1} parent=1 // pred_region
      %59 = dma.done [#allocation4], 128
    $region29: #{tpu_custom_call.1} parent=1 // pred_fallthru
      _
    // Predicated region
    $region30: #{tpu_custom_call.1} parent=1 // pred_check
      _
    $region31: #{tpu_custom_call.1} parent=1 // pred_check_branch
      %61 = sbr.rel (0) target = $region33
    $region32: #{tpu_custom_call.1} parent=1 // pred_region
      %63 = dma.done [#allocation6], 128
    $region33: #{tpu_custom_call.1} parent=1 // pred_fallthru
      _
    // Predicated region
    $region34: #{tpu_custom_call.1} parent=1 // pred_check
      _
    $region35: #{tpu_custom_call.1} parent=1 // pred_check_branch
      %65 = sbr.rel (0) target = $region37
    $region36: #{tpu_custom_call.1} parent=1 // pred_region
      %67 = dma.done [#allocation6], 2048
    $region37: #{tpu_custom_call.1} parent=1 // pred_fallthru
      _
    %v68 = vld [vmem:[#allocation3] sm:$0xff]
    %v69 = vld [vmem:[#allocation7] sm:$0xff]
    %v70 = vld [vmem:[#allocation7 + $0x8] sm:$0xff]
    %v71 = vld [vmem:[#allocation7 + $0x10] sm:$0xff]
    %v72 = vld [vmem:[#allocation7 + $0x18] sm:$0xff]
    %v73 = vld [vmem:[#allocation7 + $0x20] sm:$0xff]
    %v74 = vld [vmem:[#allocation7 + $0x28] sm:$0xff]
    %v75 = vld [vmem:[#allocation7 + $0x30] sm:$0xff]
    %v76 = vld [vmem:[#allocation7 + $0x38] sm:$0xff]
    %v77 = vld [vmem:[#allocation7 + $0x40] sm:$0xff]
    %v78 = vld [vmem:[#allocation7 + $0x48] sm:$0xff]
    %v79 = vld [vmem:[#allocation7 + $0x50] sm:$0xff]
    %v80 = vld [vmem:[#allocation7 + $0x58] sm:$0xff]
    %v81 = vld [vmem:[#allocation7 + $0x60] sm:$0xff]
    %v82 = vld [vmem:[#allocation7 + $0x68] sm:$0xff]
    %v83 = vld [vmem:[#allocation7 + $0x70] sm:$0xff]
    %v84 = vld [vmem:[#allocation7 + $0x78] sm:$0xff]
    %v85 = vld [vmem:[%s3] sm:$0x1]
    %v87 = vperm.slane %v85, 0
    %89 = vmatpush.msra.mxu0 %v84
    %90 = vmatpush.msra.mxu0 %v83
    %91 = vmatpush.msra.mxu0 %v82
    %92 = vmatpush.msra.mxu0 %v81
    %93 = vmatpush.msra.mxu0 %v80
    %94 = vmatpush.msra.mxu0 %v79
    %95 = vmatpush.msra.mxu0 %v78
    %96 = vmatpush.msra.mxu0 %v77
    %97 = vmatpush.msra.mxu0 %v76
    %98 = vmatpush.msra.mxu0 %v75
    %99 = vmatpush.msra.mxu0 %v74
    %100 = vmatpush.msra.mxu0 %v73
    %101 = vmatpush.msra.mxu0 %v72
    %102 = vmatpush.msra.mxu0 %v71
    %103 = vmatpush.msra.mxu0 %v70
    %104 = vmatpush.msra.mxu0 %v69
    %105 = vmatmul.f32.gmra.mxu0 %v68
    %v106 = vpop.f32.mrf.mxu0
    %v107 = vadd.f32 %v87, %v106
    %108 = vdwg.mxu0
    %v109 = vld [vmem:[#allocation5] sm:$0xff]
    %v110 = vadd.s32 %v109, 2147483648
    %vm112 = vcmp.lt.s32.totalorder %v110, 0
    %v113 = vmul.f32 %v107, 2.0
    %v114 = vsel %vm112, %v113, 0.0
    %v115 = vld [vmem:[%s4] sm:$0x1]
    %v117 = vperm.slane %v115, 0
    %v119 = vmul.f32 %v114, %v117
    %120 = vadd.xlane.f32.xlu0 %v119
    %v121 = vpop.xlane.xlu0 %120
    %v122 = vld [vmem:[#allocation2] sm:$0x1]
    %v124 = vperm.slane %v122, 0
    %v126 = vadd.f32 %v121, %v124
    %v127 = vxor.u32 %v126, 2147483648
    %v128 = vmul.f32 %v127, 1.442695
    %v129 = vpow.pop %v128
    %v130 = vadd.f32 %v129, 1.0
    %v131 = vrcp.pop %v130
    %v132 = vmul.f32 %v130, %v131
    %v133 = vsub.f32 1.0, %v132
    %v134 = vmul.f32 %v131, %v133
    %v135 = vadd.f32 %v131, %v134
    %vm136 = vweird.f32 %v130
    %vm137 = vweird.f32 %v131
    %vm138 = vmor %vm136, %vm137
    %v139 = vsel %vm138, %v131, %v135
    %v140 = vand.u32 2147483647, %v130
    %vm141 = vcmp.eq.f32.partialorder %v140, 8.507059e+37
    %v142 = vand.u32 %v130, 2147483648
    %v143 = vor.u32 1.1754944e-38, %v142
    %v144 = vsel %vm141, %v143, %v139
    %v145 = vmul.f32 1.0, %v144
    %vm146 = vcmask 7168
    %147 = vst.msk [vmem:[%s6] sm:$0xff] %vm146, %v145
    // Predicated region
    $region38: #{tpu_custom_call.1} parent=1 // pred_check
      _
    $region39: #{tpu_custom_call.1} parent=1 // pred_check_branch
      %149 = sbr.rel (0) target = $region41
    $region40: #{tpu_custom_call.1} parent=1 // pred_region
      _
    $region41: #{tpu_custom_call.1} parent=1 // pred_fallthru
      _
    // Predicated region
    $region42: #{tpu_custom_call.1} parent=1 // pred_check
      _
    $region43: #{tpu_custom_call.1} parent=1 // pred_check_branch
      %151 = sbr.rel (0) target = $region45
    $region44: #{tpu_custom_call.1} parent=1 // pred_region
      _
    $region45: #{tpu_custom_call.1} parent=1 // pred_fallthru
      _
    %152 = vsyncpa [#allocation4], 1
    %153 = vsyncpa [#allocation6], 1

</llo_original>
